<compile_context>
chip_gen: v6e
topology: v6e:2x2x1
jax: 0.10.0
libtpu: 0.0.40
codegen_flags: <defaults>
</compile_context>

<pallas_src>
import jax
import jax.numpy as jnp
from jax.experimental import pallas as pl
from jax.experimental.pallas import tpu as pltpu

# ----------------------------- model sizes ---------------------------------
S = 8        # num_samples (MC plate size)
N = 16       # number of data points
D_IN = 32    # input feature dim
D_OUT = 8    # output feature dim
SIGMA = 0.1  # observation noise scale (fixed model hyperparameter)

_DW = D_IN * D_OUT       # 256  — flattened weight width (lane-dense)
_DWB = _DW + D_OUT       # 264  — [weight | bias] joint width
_NO = N * D_OUT          # 128  — flattened obs width (lane-dense)


# ----------------------------- Pallas kernel -------------------------------
def predictive_kernel(xk_ref, loc_wb_ref, scale_wb_ref, eps_wb_ref, eps_obs_ref,
                      w_out_ref, b_out_ref, obs_out_ref):
    # All S Monte-Carlo samples in a single invocation.
    # Reparameterized joint draw of [weight | bias]  (VPU, sublane-broadcast
    # of the (1, 264) loc/scale rows over the S=8 sample rows):
    wb = loc_wb_ref[...] + scale_wb_ref[...] * eps_wb_ref[...]        # (S, 264)

    # Site outputs:
    #   weight -> (S, 256): two unmasked full-lane vregs per row.
    #   bias   -> (S, 8):   one tile, written once.
    w_out_ref[...] = wb[:, :_DW]
    b_out_ref[...] = wb[:, _DW:]

    # Single fused MXU pass covering all S samples AND the bias add:
    #   xk = [ kron(x^T, I)[i*D_OUT+o', n*D_OUT+o] = x[n,i] * d(o,o')
    #          tile(I, N)  [o',          n*D_OUT+o] = d(o,o')          ]
    #   => mean[s, n*D_OUT+o] = sum_i x[n,i] * W[s,i,o] + b[s,o]
    mean = jnp.dot(wb, xk_ref[...], preferred_element_type=jnp.float32)  # (S, 128)

    # Observation/predictive site draw, lane-dense (S, N*D_OUT).
    obs_out_ref[...] = mean + SIGMA * eps_obs_ref[...]


# ----------------------------- wrapper --------------------------------------
def predictive_functional(x, loc_w, scale_w, loc_b, scale_b,
                          eps_w, eps_b, eps_obs):
    """Returns dict of per-sample values, MC-sample dim leftmost (like
    PredictiveFunctional.forward)."""
    num_samples = eps_w.shape[0]

    # ---- layout plumbing (plain XLA ops outside the kernel) ----
    # RHS realizing  x @ W_s + b_s  as one (S, 264) @ (264, 128) matmul.
    eye = jnp.eye(D_OUT, dtype=x.dtype)
    xk = jnp.concatenate(
        [jnp.kron(x.T, eye),            # (D_IN*D_OUT, N*D_OUT) = (256, 128)
         jnp.tile(eye, (1, N))],        # (D_OUT,      N*D_OUT) = (  8, 128)
        axis=0)                         # -> (264, 128)

    loc_wb = jnp.concatenate([loc_w.reshape(1, _DW), loc_b.reshape(1, D_OUT)],
                             axis=1)                                   # (1, 264)
    scale_wb = jnp.concatenate([scale_w.reshape(1, _DW),
                                scale_b.reshape(1, D_OUT)], axis=1)    # (1, 264)
    eps_wb = jnp.concatenate([eps_w.reshape(num_samples, _DW),
                              eps_b.reshape(num_samples, D_OUT)],
                             axis=1)                                   # (S, 264)
    eps_obs_flat = eps_obs.reshape(num_samples, _NO)                   # (S, 128)

    full = lambda shape: pl.BlockSpec(shape, lambda i: (0, 0))

    w_s, b_s, obs_s = pl.pallas_call(
        predictive_kernel,
        out_shape=(
            jax.ShapeDtypeStruct((num_samples, _DW), jnp.float32),     # weight
            jax.ShapeDtypeStruct((num_samples, D_OUT), jnp.float32),   # bias
            jax.ShapeDtypeStruct((num_samples, _NO), jnp.float32),     # obs
        ),
        grid=(1,),
        in_specs=[
            full((_DWB, _NO)),            # xk
            full((1, _DWB)),              # loc_wb
            full((1, _DWB)),              # scale_wb
            full((num_samples, _DWB)),    # eps_wb
            full((num_samples, _NO)),     # eps_obs
        ],
        out_specs=[
            full((num_samples, _DW)),     # weight samples (lane-dense)
            full((num_samples, D_OUT)),   # bias samples (single tile)
            full((num_samples, _NO)),     # obs samples (lane-dense)
        ],
        compiler_params=pltpu.CompilerParams(
            dimension_semantics=("arbitrary",)),
    )(xk, loc_wb, scale_wb, eps_wb, eps_obs_flat)

    # TODO(synk): dynamic site discovery via poutine.trace has no Pallas
    # equivalent; the returned site set is fixed by the synthetic model.
    return {
        "weight": w_s.reshape(num_samples, D_IN, D_OUT),   # (S, D_in, D_out)
        "bias": b_s,                                       # (S, D_out)
        "obs": obs_s.reshape(num_samples, N, D_OUT),       # (S, N, D_out)
    }


# --------------------------------- main -------------------------------------
if __name__ == "__main__":
    key = jax.random.PRNGKey(0)
    k = jax.random.split(key, 8)

    # Deterministic synthetic inputs / guide parameters.
    x = jax.random.normal(k[0], (N, D_IN), dtype=jnp.float32)
    loc_w = jax.random.normal(k[1], (D_IN, D_OUT), dtype=jnp.float32) * 0.5
    scale_w = jax.nn.softplus(jax.random.normal(k[2], (D_IN, D_OUT))) * 0.1
    loc_b = jax.random.normal(k[3], (1, D_OUT), dtype=jnp.float32) * 0.5
    scale_b = jax.nn.softplus(jax.random.normal(k[4], (1, D_OUT))) * 0.1

    # Standard-normal reparameterization noise for each of the S samples.
    eps_w = jax.random.normal(k[5], (S, D_IN, D_OUT), dtype=jnp.float32)
    eps_b = jax.random.normal(k[6], (S, D_OUT), dtype=jnp.float32)
    eps_obs = jax.random.normal(k[7], (S, N, D_OUT), dtype=jnp.float32)

    out = jax.jit(predictive_functional)(x, loc_w, scale_w, loc_b, scale_b,
                                         eps_w, eps_b, eps_obs)
    jax.block_until_ready(out)

    # Cross-check against a pure-JAX reference of the same predictive model.
    w_ref = loc_w[None] + scale_w[None] * eps_w                        # (S, D_in, D_out)
    b_ref = loc_b + scale_b * eps_b                                    # (S, D_out)
    obs_ref = (jnp.einsum("ni,sio->sno", x, w_ref,
                          precision=jax.lax.Precision.HIGHEST)
               + b_ref[:, None, :] + SIGMA * eps_obs)                  # (S, N, D_out)

    assert out["weight"].shape == (S, D_IN, D_OUT)
    assert out["bias"].shape == (S, D_OUT)
    assert out["obs"].shape == (S, N, D_OUT)
    assert jnp.allclose(out["weight"], w_ref, atol=1e-5)
    assert jnp.allclose(out["bias"], b_ref, atol=1e-5)
    assert jnp.allclose(out["obs"], obs_ref, atol=1e-4)

    print("KERNEL_OK")
</pallas_src>

<mosaic_0001>
module attributes {stable_mosaic.version = 11 : i64} {
  func.func @predictive_kernel(%arg0: i32, %arg1: memref<264x128xf32, #tpu.memory_space<vmem>>, %arg2: memref<1x264xf32, #tpu.memory_space<vmem>>, %arg3: memref<1x264xf32, #tpu.memory_space<vmem>>, %arg4: memref<8x264xf32, #tpu.memory_space<vmem>>, %arg5: memref<8x128xf32, #tpu.memory_space<vmem>>, %arg6: memref<8x256xf32, #tpu.memory_space<vmem>>, %arg7: memref<8x8xf32, #tpu.memory_space<vmem>>, %arg8: memref<8x128xf32, #tpu.memory_space<vmem>>) attributes {dimension_semantics = [#tpu.dimension_semantics<arbitrary>], iteration_bounds = array<i64: 1>, scalar_prefetch = 0 : i64, scratch_operands = 0 : i64, tpu.core_type = #tpu.core_type<tc>, window_params = [{pipeline_mode = #tpu.pipeline_mode<synchronous>, transform_indices = @transform_0, window_bounds = array<i64: 264, 128>}, {pipeline_mode = #tpu.pipeline_mode<synchronous>, transform_indices = @transform_1, window_bounds = array<i64: 1, 264>}, {pipeline_mode = #tpu.pipeline_mode<synchronous>, transform_indices = @transform_2, window_bounds = array<i64: 1, 264>}, {pipeline_mode = #tpu.pipeline_mode<synchronous>, transform_indices = @transform_3, window_bounds = array<i64: 8, 264>}, {pipeline_mode = #tpu.pipeline_mode<synchronous>, transform_indices = @transform_4, window_bounds = array<i64: 8, 128>}, {pipeline_mode = #tpu.pipeline_mode<synchronous>, transform_indices = @transform_5, window_bounds = array<i64: 8, 256>}, {pipeline_mode = #tpu.pipeline_mode<synchronous>, transform_indices = @transform_6, window_bounds = array<i64: 8, 8>}, {pipeline_mode = #tpu.pipeline_mode<synchronous>, transform_indices = @transform_7, window_bounds = array<i64: 8, 128>}]} {
    %c0 = arith.constant 0 : index
    %c0_0 = arith.constant 0 : index
    %0 = vector.load %arg2[%c0, %c0_0] : memref<1x264xf32, #tpu.memory_space<vmem>>, vector<1x264xf32>
    %c0_1 = arith.constant 0 : index
    %c0_2 = arith.constant 0 : index
    %1 = vector.load %arg3[%c0_1, %c0_2] : memref<1x264xf32, #tpu.memory_space<vmem>>, vector<1x264xf32>
    %c0_3 = arith.constant 0 : index
    %c0_4 = arith.constant 0 : index
    %2 = vector.load %arg4[%c0_3, %c0_4] : memref<8x264xf32, #tpu.memory_space<vmem>>, vector<8x264xf32>
    %3 = vector.broadcast %1 : vector<1x264xf32> to vector<8x264xf32>
    %4 = arith.mulf %3, %2 : vector<8x264xf32>
    %5 = vector.broadcast %0 : vector<1x264xf32> to vector<8x264xf32>
    %6 = arith.addf %5, %4 : vector<8x264xf32>
    %7 = vector.extract_strided_slice %6 {offsets = [0, 0], sizes = [8, 256], strides = [1, 1]} : vector<8x264xf32> to vector<8x256xf32>
    %c0_5 = arith.constant 0 : index
    %c0_6 = arith.constant 0 : index
    %8 = vector.load %arg6[%c0_5, %c0_6] : memref<8x256xf32, #tpu.memory_space<vmem>>, vector<8x256xf32>
    tpu.vector_store %arg6[%c0_5, %c0_6], %7 {strides = array<i32>} : memref<8x256xf32, #tpu.memory_space<vmem>>, vector<8x256xf32>,
    %9 = vector.extract_strided_slice %6 {offsets = [0, 256], sizes = [8, 8], strides = [1, 1]} : vector<8x264xf32> to vector<8x8xf32>
    %c0_7 = arith.constant 0 : index
    %c0_8 = arith.constant 0 : index
    %10 = vector.load %arg7[%c0_7, %c0_8] : memref<8x8xf32, #tpu.memory_space<vmem>>, vector<8x8xf32>
    tpu.vector_store %arg7[%c0_7, %c0_8], %9 {strides = array<i32>} : memref<8x8xf32, #tpu.memory_space<vmem>>, vector<8x8xf32>,
    %c0_9 = arith.constant 0 : index
    %c0_10 = arith.constant 0 : index
    %11 = vector.load %arg1[%c0_9, %c0_10] : memref<264x128xf32, #tpu.memory_space<vmem>>, vector<264x128xf32>
    %cst = arith.constant dense<0.000000e+00> : vector<8x128xf32>
    %12 = tpu.matmul %6, %11, %cst {dimension_numbers = #tpu.dot_dimension_numbers<[1], [0], [0], [1], [0, 0, 1, 1], [], []>} : vector<8x264xf32>, vector<264x128xf32>, vector<8x128xf32> -> vector<8x128xf32>
    %c0_11 = arith.constant 0 : index
    %c0_12 = arith.constant 0 : index
    %13 = vector.load %arg5[%c0_11, %c0_12] : memref<8x128xf32, #tpu.memory_space<vmem>>, vector<8x128xf32>
    %cst_13 = arith.constant 1.000000e-01 : f32
    %14 = vector.broadcast %cst_13 : f32 to vector<8x128xf32>
    %15 = arith.mulf %14, %13 : vector<8x128xf32>
    %16 = arith.addf %12, %15 : vector<8x128xf32>
    %c0_14 = arith.constant 0 : index
    %c0_15 = arith.constant 0 : index
    %17 = vector.load %arg8[%c0_14, %c0_15] : memref<8x128xf32, #tpu.memory_space<vmem>>, vector<8x128xf32>
    tpu.vector_store %arg8[%c0_14, %c0_15], %16 {strides = array<i32>} : memref<8x128xf32, #tpu.memory_space<vmem>>, vector<8x128xf32>,
    return
  }
  func.func @transform_0(%arg0: i32) -> (i32, i32) {
    %c0_i32 = arith.constant 0 : i32
    %c0_i32_0 = arith.constant 0 : i32
    %c0_i32_1 = arith.constant 0 : i32
    return %c0_i32, %c0_i32_0 : i32, i32
  }
  func.func @transform_1(%arg0: i32) -> (i32, i32) {
    %c0_i32 = arith.constant 0 : i32
    %c0_i32_0 = arith.constant 0 : i32
    %c0_i32_1 = arith.constant 0 : i32
    return %c0_i32, %c0_i32_0 : i32, i32
  }
  func.func @transform_2(%arg0: i32) -> (i32, i32) {
    %c0_i32 = arith.constant 0 : i32
    %c0_i32_0 = arith.constant 0 : i32
    %c0_i32_1 = arith.constant 0 : i32
    return %c0_i32, %c0_i32_0 : i32, i32
  }
  func.func @transform_3(%arg0: i32) -> (i32, i32) {
    %c0_i32 = arith.constant 0 : i32
    %c0_i32_0 = arith.constant 0 : i32
    %c0_i32_1 = arith.constant 0 : i32
    return %c0_i32, %c0_i32_0 : i32, i32
  }
  func.func @transform_4(%arg0: i32) -> (i32, i32) {
    %c0_i32 = arith.constant 0 : i32
    %c0_i32_0 = arith.constant 0 : i32
    %c0_i32_1 = arith.constant 0 : i32
    return %c0_i32, %c0_i32_0 : i32, i32
  }
  func.func @transform_5(%arg0: i32) -> (i32, i32) {
    %c0_i32 = arith.constant 0 : i32
    %c0_i32_0 = arith.constant 0 : i32
    %c0_i32_1 = arith.constant 0 : i32
    return %c0_i32, %c0_i32_0 : i32, i32
  }
  func.func @transform_6(%arg0: i32) -> (i32, i32) {
    %c0_i32 = arith.constant 0 : i32
    %c0_i32_0 = arith.constant 0 : i32
    %c0_i32_1 = arith.constant 0 : i32
    return %c0_i32, %c0_i32_0 : i32, i32
  }
  func.func @transform_7(%arg0: i32) -> (i32, i32) {
    %c0_i32 = arith.constant 0 : i32
    %c0_i32_0 = arith.constant 0 : i32
    %c0_i32_1 = arith.constant 0 : i32
    return %c0_i32, %c0_i32_0 : i32, i32
  }
}

</mosaic_0001>

<llo_original>
// kernel: tile.9
$region0: #{tile.9}
  %s0 = inlined_call_operand.vmem [shape: f32[8,16,8], index: 0, kind: input, shape index: {}]
  %s1 = inlined_call_operand.vmem [shape: f32[8,128], index: 1, kind: output, shape index: {}]
  %s2 = smov 3
  %v3 = vld [vmem:[%s0] ss:$16 sm:%s2]
  %s4 = smov 12
  %v5 = vld [vmem:[%s0] ss:$16 sm:%s4]
  %vm6 = vcmask 1043458
  %v7 = vsel %vm6, %v5, %v3
  %s8 = smov 48
  %v9 = vld [vmem:[%s0] ss:$16 sm:%s8]
  %vm10 = vcmask 1045508
  %v11 = vsel %vm10, %v9, %v7
  %s12 = smov 192
  %v13 = vld [vmem:[%s0] ss:$16 sm:%s12]
  %vm14 = vcmask 1047558
  %v15 = vsel %vm14, %v13, %v11
  %vm16 = vcmask 64512
  %17 = vst.msk [vmem:[%s1] sm:$0xff] %vm16, %v15
  %s18 = scalar_lea.vmem %s0, 15
  %s19 = smov 3
  %v20 = vld [vmem:[%s18] ss:$16 sm:%s19]
  %s21 = scalar_lea.vmem %s0, 15
  %s22 = smov 12
  %v23 = vld [vmem:[%s21] ss:$16 sm:%s22]
  %vm24 = vcmask 1043458
  %v25 = vsel %vm24, %v23, %v20
  %s26 = scalar_lea.vmem %s0, 15
  %s27 = smov 48
  %v28 = vld [vmem:[%s26] ss:$16 sm:%s27]
  %vm29 = vcmask 1045508
  %v30 = vsel %vm29, %v28, %v25
  %s31 = scalar_lea.vmem %s0, 15
  %s32 = smov 192
  %v33 = vld [vmem:[%s31] ss:$16 sm:%s32]
  %vm34 = vcmask 1047558
  %v35 = vsel %vm34, %v33, %v30
  %36 = vrot.lane.b32.xlu0 %v35, 120
  %v37 = vpop.permute.xlu0 %36
  %vm38 = vcmask 1048512
  %39 = vst.msk [vmem:[%s1] sm:$0xff] %vm38, %v37
  %s40 = scalar_lea.vmem %s0, 14
  %s41 = smov 3
  %v42 = vld [vmem:[%s40] ss:$16 sm:%s41]
  %s43 = scalar_lea.vmem %s0, 14
  %s44 = smov 12
  %v45 = vld [vmem:[%s43] ss:$16 sm:%s44]
  %vm46 = vcmask 1043458
  %v47 = vsel %vm46, %v45, %v42
  %s48 = scalar_lea.vmem %s0, 14
  %s49 = smov 48
  %v50 = vld [vmem:[%s48] ss:$16 sm:%s49]
  %vm51 = vcmask 1045508
  %v52 = vsel %vm51, %v50, %v47
  %s53 = scalar_lea.vmem %s0, 14
  %s54 = smov 192
  %v55 = vld [vmem:[%s53] ss:$16 sm:%s54]
  %vm56 = vcmask 1047558
  %v57 = vsel %vm56, %v55, %v52
  %58 = vrot.lane.b32.xlu0 %v57, 112
  %v59 = vpop.permute.xlu0 %58
  %vm60 = vcmask 982912
  %61 = vst.msk [vmem:[%s1] sm:$0xff] %vm60, %v59
  %s62 = scalar_lea.vmem %s0, 13
  %s63 = smov 3
  %v64 = vld [vmem:[%s62] ss:$16 sm:%s63]
  %s65 = scalar_lea.vmem %s0, 13
  %s66 = smov 12
  %v67 = vld [vmem:[%s65] ss:$16 sm:%s66]
  %vm68 = vcmask 1043458
  %v69 = vsel %vm68, %v67, %v64
  %s70 = scalar_lea.vmem %s0, 13
  %s71 = smov 48
  %v72 = vld [vmem:[%s70] ss:$16 sm:%s71]
  %vm73 = vcmask 1045508
  %v74 = vsel %vm73, %v72, %v69
  %s75 = scalar_lea.vmem %s0, 13
  %s76 = smov 192
  %v77 = vld [vmem:[%s75] ss:$16 sm:%s76]
  %vm78 = vcmask 1047558
  %v79 = vsel %vm78, %v77, %v74
  %80 = vrot.lane.b32.xlu0 %v79, 104
  %v81 = vpop.permute.xlu0 %80
  %vm82 = vcmask 917312
  %83 = vst.msk [vmem:[%s1] sm:$0xff] %vm82, %v81
  %s84 = scalar_lea.vmem %s0, 12
  %s85 = smov 3
  %v86 = vld [vmem:[%s84] ss:$16 sm:%s85]
  %s87 = scalar_lea.vmem %s0, 12
  %s88 = smov 12
  %v89 = vld [vmem:[%s87] ss:$16 sm:%s88]
  %vm90 = vcmask 1043458
  %v91 = vsel %vm90, %v89, %v86
  %s92 = scalar_lea.vmem %s0, 12
  %s93 = smov 48
  %v94 = vld [vmem:[%s92] ss:$16 sm:%s93]
  %vm95 = vcmask 1045508
  %v96 = vsel %vm95, %v94, %v91
  %s97 = scalar_lea.vmem %s0, 12
  %s98 = smov 192
  %v99 = vld [vmem:[%s97] ss:$16 sm:%s98]
  %vm100 = vcmask 1047558
  %v101 = vsel %vm100, %v99, %v96
  %102 = vrot.lane.b32.xlu0 %v101, 96
  %v103 = vpop.permute.xlu0 %102
  %vm104 = vcmask 851712
  %105 = vst.msk [vmem:[%s1] sm:$0xff] %vm104, %v103
  %s106 = scalar_lea.vmem %s0, 11
  %s107 = smov 3
  %v108 = vld [vmem:[%s106] ss:$16 sm:%s107]
  %s109 = scalar_lea.vmem %s0, 11
  %s110 = smov 12
  %v111 = vld [vmem:[%s109] ss:$16 sm:%s110]
  %vm112 = vcmask 1043458
  %v113 = vsel %vm112, %v111, %v108
  %s114 = scalar_lea.vmem %s0, 11
  %s115 = smov 48
  %v116 = vld [vmem:[%s114] ss:$16 sm:%s115]
  %vm117 = vcmask 1045508
  %v118 = vsel %vm117, %v116, %v113
  %s119 = scalar_lea.vmem %s0, 11
  %s120 = smov 192
  %v121 = vld [vmem:[%s119] ss:$16 sm:%s120]
  %vm122 = vcmask 1047558
  %v123 = vsel %vm122, %v121, %v118
  %124 = vrot.lane.b32.xlu0 %v123, 88
  %v125 = vpop.permute.xlu0 %124
  %vm126 = vcmask 786112
  %127 = vst.msk [vmem:[%s1] sm:$0xff] %vm126, %v125
  %s128 = scalar_lea.vmem %s0, 10
  %s129 = smov 3
  %v130 = vld [vmem:[%s128] ss:$16 sm:%s129]
  %s131 = scalar_lea.vmem %s0, 10
  %s132 = smov 12
  %v133 = vld [vmem:[%s131] ss:$16 sm:%s132]
  %vm134 = vcmask 1043458
  %v135 = vsel %vm134, %v133, %v130
  %s136 = scalar_lea.vmem %s0, 10
  %s137 = smov 48
  %v138 = vld [vmem:[%s136] ss:$16 sm:%s137]
  %vm139 = vcmask 1045508
  %v140 = vsel %vm139, %v138, %v135
  %s141 = scalar_lea.vmem %s0, 10
  %s142 = smov 192
  %v143 = vld [vmem:[%s141] ss:$16 sm:%s142]
  %vm144 = vcmask 1047558
  %v145 = vsel %vm144, %v143, %v140
  %146 = vrot.lane.b32.xlu0 %v145, 80
  %v147 = vpop.permute.xlu0 %146
  %vm148 = vcmask 720512
  %149 = vst.msk [vmem:[%s1] sm:$0xff] %vm148, %v147
  %s150 = scalar_lea.vmem %s0, 9
  %s151 = smov 3
  %v152 = vld [vmem:[%s150] ss:$16 sm:%s151]
  %s153 = scalar_lea.vmem %s0, 9
  %s154 = smov 12
  %v155 = vld [vmem:[%s153] ss:$16 sm:%s154]
  %vm156 = vcmask 1043458
  %v157 = vsel %vm156, %v155, %v152
  %s158 = scalar_lea.vmem %s0, 9
  %s159 = smov 48
  %v160 = vld [vmem:[%s158] ss:$16 sm:%s159]
  %vm161 = vcmask 1045508
  %v162 = vsel %vm161, %v160, %v157
  %s163 = scalar_lea.vmem %s0, 9
  %s164 = smov 192
  %v165 = vld [vmem:[%s163] ss:$16 sm:%s164]
  %vm166 = vcmask 1047558
  %v167 = vsel %vm166, %v165, %v162
  %168 = vrot.lane.b32.xlu0 %v167, 72
  %v169 = vpop.permute.xlu0 %168
  %vm170 = vcmask 654912
  %171 = vst.msk [vmem:[%s1] sm:$0xff] %vm170, %v169
  %s172 = scalar_lea.vmem %s0, 8
  %s173 = smov 3
  %v174 = vld [vmem:[%s172] ss:$16 sm:%s173]
  %s175 = scalar_lea.vmem %s0, 8
  %s176 = smov 12
  %v177 = vld [vmem:[%s175] ss:$16 sm:%s176]
  %vm178 = vcmask 1043458
  %v179 = vsel %vm178, %v177, %v174
  %s180 = scalar_lea.vmem %s0, 8
  %s181 = smov 48
  %v182 = vld [vmem:[%s180] ss:$16 sm:%s181]
  %vm183 = vcmask 1045508
  %v184 = vsel %vm183, %v182, %v179
  %s185 = scalar_lea.vmem %s0, 8
  %s186 = smov 192
  %v187 = vld [vmem:[%s185] ss:$16 sm:%s186]
  %vm188 = vcmask 1047558
  %v189 = vsel %vm188, %v187, %v184
  %190 = vrot.lane.b32.xlu0 %v189, 64
  %v191 = vpop.permute.xlu0 %190
  %vm192 = vcmask 589312
  %193 = vst.msk [vmem:[%s1] sm:$0xff] %vm192, %v191
  %s194 = scalar_lea.vmem %s0, 7
  %s195 = smov 3
  %v196 = vld [vmem:[%s194] ss:$16 sm:%s195]
  %s197 = scalar_lea.vmem %s0, 7
  %s198 = smov 12
  %v199 = vld [vmem:[%s197] ss:$16 sm:%s198]
  %vm200 = vcmask 1043458
  %v201 = vsel %vm200, %v199, %v196
  %s202 = scalar_lea.vmem %s0, 7
  %s203 = smov 48
  %v204 = vld [vmem:[%s202] ss:$16 sm:%s203]
  %vm205 = vcmask 1045508
  %v206 = vsel %vm205, %v204, %v201
  %s207 = scalar_lea.vmem %s0, 7
  %s208 = smov 192
  %v209 = vld [vmem:[%s207] ss:$16 sm:%s208]
  %vm210 = vcmask 1047558
  %v211 = vsel %vm210, %v209, %v206
  %212 = vrot.lane.b32.xlu0 %v211, 56
  %v213 = vpop.permute.xlu0 %212
  %vm214 = vcmask 523712
  %215 = vst.msk [vmem:[%s1] sm:$0xff] %vm214, %v213
  %s216 = scalar_lea.vmem %s0, 6
  %s217 = smov 3
  %v218 = vld [vmem:[%s216] ss:$16 sm:%s217]
  %s219 = scalar_lea.vmem %s0, 6
  %s220 = smov 12
  %v221 = vld [vmem:[%s219] ss:$16 sm:%s220]
  %vm222 = vcmask 1043458
  %v223 = vsel %vm222, %v221, %v218
  %s224 = scalar_lea.vmem %s0, 6
  %s225 = smov 48
  %v226 = vld [vmem:[%s224] ss:$16 sm:%s225]
  %vm227 = vcmask 1045508
  %v228 = vsel %vm227, %v226, %v223
  %s229 = scalar_lea.vmem %s0, 6
  %s230 = smov 192
  %v231 = vld [vmem:[%s229] ss:$16 sm:%s230]
  %vm232 = vcmask 1047558
  %v233 = vsel %vm232, %v231, %v228
  %234 = vrot.lane.b32.xlu0 %v233, 48
  %v235 = vpop.permute.xlu0 %234
  %vm236 = vcmask 458112
  %237 = vst.msk [vmem:[%s1] sm:$0xff] %vm236, %v235
  %s238 = scalar_lea.vmem %s0, 5
  %s239 = smov 3
  %v240 = vld [vmem:[%s238] ss:$16 sm:%s239]
  %s241 = scalar_lea.vmem %s0, 5
  %s242 = smov 12
  %v243 = vld [vmem:[%s241] ss:$16 sm:%s242]
  %vm244 = vcmask 1043458
  %v245 = vsel %vm244, %v243, %v240
  %s246 = scalar_lea.vmem %s0, 5
  %s247 = smov 48
  %v248 = vld [vmem:[%s246] ss:$16 sm:%s247]
  %vm249 = vcmask 1045508
  %v250 = vsel %vm249, %v248, %v245
  %s251 = scalar_lea.vmem %s0, 5
  %s252 = smov 192
  %v253 = vld [vmem:[%s251] ss:$16 sm:%s252]
  %vm254 = vcmask 1047558
  %v255 = vsel %vm254, %v253, %v250
  %256 = vrot.lane.b32.xlu0 %v255, 40
  %v257 = vpop.permute.xlu0 %256
  %vm258 = vcmask 392512
  %259 = vst.msk [vmem:[%s1] sm:$0xff] %vm258, %v257
  %s260 = scalar_lea.vmem %s0, 4
  %s261 = smov 3
  %v262 = vld [vmem:[%s260] ss:$16 sm:%s261]
  %s263 = scalar_lea.vmem %s0, 4
  %s264 = smov 12
  %v265 = vld [vmem:[%s263] ss:$16 sm:%s264]
  %vm266 = vcmask 1043458
  %v267 = vsel %vm266, %v265, %v262
  %s268 = scalar_lea.vmem %s0, 4
  %s269 = smov 48
  %v270 = vld [vmem:[%s268] ss:$16 sm:%s269]
  %vm271 = vcmask 1045508
  %v272 = vsel %vm271, %v270, %v267
  %s273 = scalar_lea.vmem %s0, 4
  %s274 = smov 192
  %v275 = vld [vmem:[%s273] ss:$16 sm:%s274]
  %vm276 = vcmask 1047558
  %v277 = vsel %vm276, %v275, %v272
  %278 = vrot.lane.b32.xlu0 %v277, 32
  %v279 = vpop.permute.xlu0 %278
  %vm280 = vcmask 326912
  %281 = vst.msk [vmem:[%s1] sm:$0xff] %vm280, %v279
  %s282 = scalar_lea.vmem %s0, 3
  %s283 = smov 3
  %v284 = vld [vmem:[%s282] ss:$16 sm:%s283]
  %s285 = scalar_lea.vmem %s0, 3
  %s286 = smov 12
  %v287 = vld [vmem:[%s285] ss:$16 sm:%s286]
  %vm288 = vcmask 1043458
  %v289 = vsel %vm288, %v287, %v284
  %s290 = scalar_lea.vmem %s0, 3
  %s291 = smov 48
  %v292 = vld [vmem:[%s290] ss:$16 sm:%s291]
  %vm293 = vcmask 1045508
  %v294 = vsel %vm293, %v292, %v289
  %s295 = scalar_lea.vmem %s0, 3
  %s296 = smov 192
  %v297 = vld [vmem:[%s295] ss:$16 sm:%s296]
  %vm298 = vcmask 1047558
  %v299 = vsel %vm298, %v297, %v294
  %300 = vrot.lane.b32.xlu0 %v299, 24
  %v301 = vpop.permute.xlu0 %300
  %vm302 = vcmask 261312
  %303 = vst.msk [vmem:[%s1] sm:$0xff] %vm302, %v301
  %s304 = scalar_lea.vmem %s0, 2
  %s305 = smov 3
  %v306 = vld [vmem:[%s304] ss:$16 sm:%s305]
  %s307 = scalar_lea.vmem %s0, 2
  %s308 = smov 12
  %v309 = vld [vmem:[%s307] ss:$16 sm:%s308]
  %vm310 = vcmask 1043458
  %v311 = vsel %vm310, %v309, %v306
  %s312 = scalar_lea.vmem %s0, 2
  %s313 = smov 48
  %v314 = vld [vmem:[%s312] ss:$16 sm:%s313]
  %vm315 = vcmask 1045508
  %v316 = vsel %vm315, %v314, %v311
  %s317 = scalar_lea.vmem %s0, 2
  %s318 = smov 192
  %v319 = vld [vmem:[%s317] ss:$16 sm:%s318]
  %vm320 = vcmask 1047558
  %v321 = vsel %vm320, %v319, %v316
  %322 = vrot.lane.b32.xlu0 %v321, 16
  %v323 = vpop.permute.xlu0 %322
  %vm324 = vcmask 195712
  %325 = vst.msk [vmem:[%s1] sm:$0xff] %vm324, %v323
  %s326 = scalar_lea.vmem %s0, 1
  %s327 = smov 3
  %v328 = vld [vmem:[%s326] ss:$16 sm:%s327]
  %s329 = scalar_lea.vmem %s0, 1
  %s330 = smov 12
  %v331 = vld [vmem:[%s329] ss:$16 sm:%s330]
  %vm332 = vcmask 1043458
  %v333 = vsel %vm332, %v331, %v328
  %s334 = scalar_lea.vmem %s0, 1
  %s335 = smov 48
  %v336 = vld [vmem:[%s334] ss:$16 sm:%s335]
  %vm337 = vcmask 1045508
  %v338 = vsel %vm337, %v336, %v333
  %s339 = scalar_lea.vmem %s0, 1
  %s340 = smov 192
  %v341 = vld [vmem:[%s339] ss:$16 sm:%s340]
  %vm342 = vcmask 1047558
  %v343 = vsel %vm342, %v341, %v338
  %344 = vrot.lane.b32.xlu0 %v343, 8
  %v345 = vpop.permute.xlu0 %344
  %vm346 = vcmask 130112
  %347 = vst.msk [vmem:[%s1] sm:$0xff] %vm346, %v345

// kernel: predictive_functional.1
$region0: #{predictive_functional.1}
  #allocation0 [shape = 'u32[]', space=smem, size = 0x4, offset = 0x4, fixed_abs, tag = 'smem constant byte address 0x4 - core index']
  #allocation1 [shape = 'u32[144,128]{1,0:T(1,128)}', space=vmem, size = 0x12000, scoped, tag = 'internal scratch']
  %s0 = inlined_call_operand.vmem [shape: f32[264,128], index: 0, kind: input, shape index: {}]
  %s1 = inlined_call_operand.vmem [shape: f32[1,264], index: 1, kind: input, shape index: {}]
  %s2 = inlined_call_operand.vmem [shape: f32[1,264], index: 2, kind: input, shape index: {}]
  %s3 = inlined_call_operand.vmem [shape: f32[8,264], index: 3, kind: input, shape index: {}]
  %s4 = inlined_call_operand.vmem [shape: f32[8,128], index: 4, kind: input, shape index: {}]
  %s5 = inlined_call_operand.vmem [shape: f32[8,256], index: 5, kind: output, shape index: {0}]
  %s6 = inlined_call_operand.hbm [shape: f32[8,8], index: 6, kind: output, shape index: {1}]
  %s7 = inlined_call_operand.vmem [shape: f32[8,128], index: 7, kind: output, shape index: {2}]
  %8 = xla_tuple %s5, %s6, %s7
  %s9 = sld [smem:[#allocation0]]
  $region46: #{predictive_functional.1} parent=0
    _
  %s11 = ssub.s32 1, %s9
  %s12 = scalar_select 0, %s11, %s9
  $region1: #{predictive_functional.1} parent=0
    #allocation2 [shape = 'u8[4096]{0}', space=vmem, size = 0x1000, scoped, tag = 'output window, operand 1, single buffered']
    #allocation3 [shape = 's32[1]{0}', space=sflag, size = 0x4, scoped, tag = 'scoped memory for predictive_functional.1']
    %13 = vsyncpa [#allocation3], 0
    // Predicated region
    $region2: #{predictive_functional.1} parent=1 // pred_check
      _
    $region3: #{predictive_functional.1} parent=1 // pred_check_branch
      %15 = sbr.rel (0) target = $region5
    $region4: #{predictive_functional.1} parent=1 // pred_region
      _
    $region5: #{predictive_functional.1} parent=1 // pred_fallthru
      _
    // Predicated region
    $region6: #{predictive_functional.1} parent=1 // pred_check
      _
    $region7: #{predictive_functional.1} parent=1 // pred_check_branch
      %17 = sbr.rel (0) target = $region9
    $region8: #{predictive_functional.1} parent=1 // pred_region
      _
    $region9: #{predictive_functional.1} parent=1 // pred_fallthru
      _
    // Predicated region
    $region10: #{predictive_functional.1} parent=1 // pred_check
      _
    $region11: #{predictive_functional.1} parent=1 // pred_check_branch
      %19 = sbr.rel (0) target = $region13
    $region12: #{predictive_functional.1} parent=1 // pred_region
      _
    $region13: #{predictive_functional.1} parent=1 // pred_fallthru
      _
    // Predicated region
    $region14: #{predictive_functional.1} parent=1 // pred_check
      _
    $region15: #{predictive_functional.1} parent=1 // pred_check_branch
      %21 = sbr.rel (0) target = $region17
    $region16: #{predictive_functional.1} parent=1 // pred_region
      _
    $region17: #{predictive_functional.1} parent=1 // pred_fallthru
      _
    // Predicated region
    $region18: #{predictive_functional.1} parent=1 // pred_check
      _
    $region19: #{predictive_functional.1} parent=1 // pred_check_branch
      %23 = sbr.rel (0) target = $region21
    $region20: #{predictive_functional.1} parent=1 // pred_region
      _
    $region21: #{predictive_functional.1} parent=1 // pred_fallthru
      _
    %v24 = vld [vmem:[%s1] sm:$0x7]
    %v25 = vld [vmem:[%s2] sm:$0x7]
    %v26 = vld [vmem:[%s3] sm:$0xff]
    %v27 = vld [vmem:[%s3 + $0x8] sm:$0xff]
    %v28 = vld [vmem:[%s3 + $0x10] sm:$0xff]
    %v30 = vlaneseq
    %v31 = vshrl.u32 %v30, 7
    %v32 = vsub.s32 0, %v31
    %v33 = vrot.slane %v25, %v32
    %v34 = vlaneseq
    %v35 = vshrl.u32 %v34, 7
    %v36 = vsub.s32 1, %v35
    %v37 = vrot.slane %v25, %v36
    %v38 = vlaneseq
    %v39 = vshrl.u32 %v38, 7
    %v40 = vsub.s32 2, %v39
    %v41 = vrot.slane %v25, %v40
    %v45 = vmul.f32 %v33, %v26
    %v46 = vmul.f32 %v37, %v27
    %v47 = vmul.f32 %v41, %v28
    %v49 = vlaneseq
    %v50 = vshrl.u32 %v49, 7
    %v51 = vsub.s32 0, %v50
    %v52 = vrot.slane %v24, %v51
    %v53 = vlaneseq
    %v54 = vshrl.u32 %v53, 7
    %v55 = vsub.s32 1, %v54
    %v56 = vrot.slane %v24, %v55
    %v57 = vlaneseq
    %v58 = vshrl.u32 %v57, 7
    %v59 = vsub.s32 2, %v58
    %v60 = vrot.slane %v24, %v59
    %v64 = vadd.f32 %v52, %v45
    %v65 = vadd.f32 %v56, %v46
    %v66 = vadd.f32 %v60, %v47
    %67 = vst [vmem:[%s5] sm:$0xff] %v64
    %68 = vst [vmem:[%s5 + $0x8] sm:$0xff] %v65
    %vm69 = vcmask 64512
    %70 = vst.msk [vmem:[#allocation2] sm:$0xff] %vm69, %v66
    %v71 = vld [vmem:[%s0] sm:$0xff]
    %v72 = vld [vmem:[%s0 + $0x8] sm:$0xff]
    %v73 = vld [vmem:[%s0 + $0x10] sm:$0xff]
    %v74 = vld [vmem:[%s0 + $0x18] sm:$0xff]
    %v75 = vld [vmem:[%s0 + $0x20] sm:$0xff]
    %v76 = vld [vmem:[%s0 + $0x28] sm:$0xff]
    %v77 = vld [vmem:[%s0 + $0x30] sm:$0xff]
    %v78 = vld [vmem:[%s0 + $0x38] sm:$0xff]
    %v79 = vld [vmem:[%s0 + $0x40] sm:$0xff]
    %v80 = vld [vmem:[%s0 + $0x48] sm:$0xff]
    %v81 = vld [vmem:[%s0 + $0x50] sm:$0xff]
    %v82 = vld [vmem:[%s0 + $0x58] sm:$0xff]
    %v83 = vld [vmem:[%s0 + $0x60] sm:$0xff]
    %v84 = vld [vmem:[%s0 + $0x68] sm:$0xff]
    %v85 = vld [vmem:[%s0 + $0x70] sm:$0xff]
    %v86 = vld [vmem:[%s0 + $0x78] sm:$0xff]
    %v87 = vld [vmem:[%s0 + $0x80] sm:$0xff]
    %v88 = vld [vmem:[%s0 + $0x88] sm:$0xff]
    %v89 = vld [vmem:[%s0 + $0x90] sm:$0xff]
    %v90 = vld [vmem:[%s0 + $0x98] sm:$0xff]
    %v91 = vld [vmem:[%s0 + $0xa0] sm:$0xff]
    %v92 = vld [vmem:[%s0 + $0xa8] sm:$0xff]
    %v93 = vld [vmem:[%s0 + $0xb0] sm:$0xff]
    %v94 = vld [vmem:[%s0 + $0xb8] sm:$0xff]
    %v95 = vld [vmem:[%s0 + $0xc0] sm:$0xff]
    %v96 = vld [vmem:[%s0 + $0xc8] sm:$0xff]
    %v97 = vld [vmem:[%s0 + $0xd0] sm:$0xff]
    %v98 = vld [vmem:[%s0 + $0xd8] sm:$0xff]
    %v99 = vld [vmem:[%s0 + $0xe0] sm:$0xff]
    %v100 = vld [vmem:[%s0 + $0xe8] sm:$0xff]
    %v101 = vld [vmem:[%s0 + $0xf0] sm:$0xff]
    %v102 = vld [vmem:[%s0 + $0xf8] sm:$0xff]
    %v103 = vld [vmem:[%s0 + $0x100] sm:$0xff]
    %v104 = vld [vmem:[%s4] sm:$0xff]
    %v105 = vmul.f32 %v104, 0.1
    %v107 = vsel %vm69, %v66, 0
    %109 = vmatprep.subr.mxu0 0.0
    %110 = vmatpush1.msra.mxu0 %v86
    %111 = vmatprep.subr.mxu0 0.0
    %112 = vmatpush1.msra.mxu0 %v85
    %113 = vmatprep.subr.mxu0 0.0
    %114 = vmatpush1.msra.mxu0 %v84
    %115 = vmatprep.subr.mxu0 0.0
    %116 = vmatpush1.msra.mxu0 %v83
    %117 = vmatprep.subr.mxu0 0.0
    %118 = vmatpush1.msra.mxu0 %v82
    %119 = vmatprep.subr.mxu0 0.0
    %120 = vmatpush1.msra.mxu0 %v81
    %121 = vmatprep.subr.mxu0 0.0
    %122 = vmatpush1.msra.mxu0 %v80
    %123 = vmatprep.subr.mxu0 0.0
    %124 = vmatpush1.msra.mxu0 %v79
    %125 = vmatprep.subr.mxu0 0.0
    %126 = vmatpush1.msra.mxu0 %v78
    %127 = vmatprep.subr.mxu0 0.0
    %128 = vmatpush1.msra.mxu0 %v77
    %129 = vmatprep.subr.mxu0 0.0
    %130 = vmatpush1.msra.mxu0 %v76
    %131 = vmatprep.subr.mxu0 0.0
    %132 = vmatpush1.msra.mxu0 %v75
    %133 = vmatprep.subr.mxu0 0.0
    %134 = vmatpush1.msra.mxu0 %v74
    %135 = vmatprep.subr.mxu0 0.0
    %136 = vmatpush1.msra.mxu0 %v73
    %137 = vmatprep.subr.mxu0 0.0
    %138 = vmatpush1.msra.mxu0 %v72
    %139 = vmatprep.subr.mxu0 0.0
    %140 = vmatpush1.msra.mxu0 %v71
    %141 = vmatprep.subr.mxu0 0.0
    %142 = vmatpush2.msra.mxu0 %v102
    %143 = vmatprep.subr.mxu0 0.0
    %144 = vmatpush2.msra.mxu0 %v101
    %145 = vmatprep.subr.mxu0 0.0
    %146 = vmatpush2.msra.mxu0 %v100
    %147 = vmatprep.subr.mxu0 0.0
    %148 = vmatpush2.msra.mxu0 %v99
    %149 = vmatprep.subr.mxu0 0.0
    %150 = vmatpush2.msra.mxu0 %v98
    %151 = vmatprep.subr.mxu0 0.0
    %152 = vmatpush2.msra.mxu0 %v97
    %153 = vmatprep.subr.mxu0 0.0
    %154 = vmatpush2.msra.mxu0 %v96
    %155 = vmatprep.subr.mxu0 0.0
    %156 = vmatpush2.msra.mxu0 %v95
    %157 = vmatprep.subr.mxu0 0.0
    %158 = vmatpush2.msra.mxu0 %v94
    %159 = vmatprep.subr.mxu0 0.0
    %160 = vmatpush2.msra.mxu0 %v93
    %161 = vmatprep.subr.mxu0 0.0
    %162 = vmatpush2.msra.mxu0 %v92
    %163 = vmatprep.subr.mxu0 0.0
    %164 = vmatpush2.msra.mxu0 %v91
    %165 = vmatprep.subr.mxu0 0.0
    %166 = vmatpush2.msra.mxu0 %v90
    %167 = vmatprep.subr.mxu0 0.0
    %168 = vmatpush2.msra.mxu0 %v89
    %169 = vmatprep.subr.mxu0 0.0
    %170 = vmatpush2.msra.mxu0 %v88
    %171 = vmatprep.subr.mxu0 0.0
    %172 = vmatpush2.msra.mxu0 %v87
    %173 = vmatprep.mubr.f32.mxu0 %v65
    %174 = vmatmul.mubr.f32.gmra.mxu0 %v64
    %v175 = vpop.f32.mrf.mxu0
    %v176 = vadd.f32 %v105, %v175
    %v177 = vpop.f32.mrf.mxu0
    %178 = vdwg.mxu0
    %179 = vmatprep.subr.mxu0 0.0
    %180 = vmatpush1.msra.mxu0 0.0
    %181 = vmatprep.subr.mxu0 0.0
    %182 = vmatpush1.msra.mxu0 0.0
    %183 = vmatprep.subr.mxu0 0.0
    %184 = vmatpush1.msra.mxu0 0.0
    %185 = vmatprep.subr.mxu0 0.0
    %186 = vmatpush1.msra.mxu0 0.0
    %187 = vmatprep.subr.mxu0 0.0
    %188 = vmatpush1.msra.mxu0 0.0
    %189 = vmatprep.subr.mxu0 0.0
    %190 = vmatpush1.msra.mxu0 0.0
    %191 = vmatprep.subr.mxu0 0.0
    %192 = vmatpush1.msra.mxu0 0.0
    %193 = vmatprep.subr.mxu0 0.0
    %194 = vmatpush1.msra.mxu0 0.0
    %195 = vmatprep.subr.mxu0 0.0
    %196 = vmatpush1.msra.mxu0 0.0
    %197 = vmatprep.subr.mxu0 0.0
    %198 = vmatpush1.msra.mxu0 0.0
    %199 = vmatprep.subr.mxu0 0.0
    %200 = vmatpush1.msra.mxu0 0.0
    %201 = vmatprep.subr.mxu0 0.0
    %202 = vmatpush1.msra.mxu0 0.0
    %203 = vmatprep.subr.mxu0 0.0
    %204 = vmatpush1.msra.mxu0 0.0
    %205 = vmatprep.subr.mxu0 0.0
    %206 = vmatpush1.msra.mxu0 0.0
    %207 = vmatprep.subr.mxu0 0.0
    %208 = vmatpush1.msra.mxu0 0.0
    %209 = vmatprep.subr.mxu0 0.0
    %210 = vmatpush1.msra.mxu0 %v103
    %211 = vmatprep.subr.mxu0 0.0
    %212 = vmatpush2.msra.mxu0 0.0
    %213 = vmatprep.subr.mxu0 0.0
    %214 = vmatpush2.msra.mxu0 0.0
    %215 = vmatprep.subr.mxu0 0.0
    %216 = vmatpush2.msra.mxu0 0.0
    %217 = vmatprep.subr.mxu0 0.0
    %218 = vmatpush2.msra.mxu0 0.0
    %219 = vmatprep.subr.mxu0 0.0
    %220 = vmatpush2.msra.mxu0 0.0
    %221 = vmatprep.subr.mxu0 0.0
    %222 = vmatpush2.msra.mxu0 0.0
    %223 = vmatprep.subr.mxu0 0.0
    %224 = vmatpush2.msra.mxu0 0.0
    %225 = vmatprep.subr.mxu0 0.0
    %226 = vmatpush2.msra.mxu0 0.0
    %227 = vmatprep.subr.mxu0 0.0
    %228 = vmatpush2.msra.mxu0 0.0
    %229 = vmatprep.subr.mxu0 0.0
    %230 = vmatpush2.msra.mxu0 0.0
    %231 = vmatprep.subr.mxu0 0.0
    %232 = vmatpush2.msra.mxu0 0.0
    %233 = vmatprep.subr.mxu0 0.0
    %234 = vmatpush2.msra.mxu0 0.0
    %235 = vmatprep.subr.mxu0 0.0
    %236 = vmatpush2.msra.mxu0 0.0
    %237 = vmatprep.subr.mxu0 0.0
    %238 = vmatpush2.msra.mxu0 0.0
    %239 = vmatprep.subr.mxu0 0.0
    %240 = vmatpush2.msra.mxu0 0.0
    %241 = vmatprep.subr.mxu0 0.0
    %242 = vmatpush2.msra.mxu0 0.0
    %243 = vmatprep.mubr.f32.mxu0 0.0
    %244 = vmatmul.mubr.f32.gmra.mxu0 %v107
    %v245 = vpop.f32.mrf.mxu0
    %v246 = vadd.f32 %v176, %v245
    %v247 = vpop.f32.mrf.mxu0
    %248 = vdwg.mxu0
    %249 = vst [vmem:[%s7] sm:$0xff] %v246
    // Predicated region
    $region22: #{predictive_functional.1} parent=1 // pred_check
      _
    $region23: #{predictive_functional.1} parent=1 // pred_check_branch
      %251 = sbr.rel (0) target = $region25
    $region24: #{predictive_functional.1} parent=1 // pred_region
      _
    $region25: #{predictive_functional.1} parent=1 // pred_fallthru
      _
    // Predicated region
    $region26: #{predictive_functional.1} parent=1 // pred_check
      _
    $region27: #{predictive_functional.1} parent=1 // pred_check_branch
      %253 = sbr.rel (0) target = $region29
    $region28: #{predictive_functional.1} parent=1 // pred_region
      %s255 = ssub.s32 128, 128
      %256 = vsyncadd [#allocation3], %s255
      %s258 = sshll.u32 [#allocation2], 4
      %s259 = int_to_ptr.vmem [resolvable:$true] %s258
      %261 = dma.vmem_to_hbm [thread:$0]  %s259, 128, %s6, [#allocation3]
    $region29: #{predictive_functional.1} parent=1 // pred_fallthru
      _
    // Predicated region
    $region30: #{predictive_functional.1} parent=1 // pred_check
      _
    $region31: #{predictive_functional.1} parent=1 // pred_check_branch
      %263 = sbr.rel (0) target = $region33
    $region32: #{predictive_functional.1} parent=1 // pred_region
      _
    $region33: #{predictive_functional.1} parent=1 // pred_fallthru
      _
    // Predicated region
    $region34: #{predictive_functional.1} parent=1 // pred_check
      _
    $region35: #{predictive_functional.1} parent=1 // pred_check_branch
      %265 = sbr.rel (0) target = $region37
    $region36: #{predictive_functional.1} parent=1 // pred_region
      _
    $region37: #{predictive_functional.1} parent=1 // pred_fallthru
      _
    // Predicated region
    $region38: #{predictive_functional.1} parent=1 // pred_check
      _
    $region39: #{predictive_functional.1} parent=1 // pred_check_branch
      %267 = sbr.rel (0) target = $region41
    $region40: #{predictive_functional.1} parent=1 // pred_region
      %268 = dma.done [#allocation3], 128
    $region41: #{predictive_functional.1} parent=1 // pred_fallthru
      _
    // Predicated region
    $region42: #{predictive_functional.1} parent=1 // pred_check
      _
    $region43: #{predictive_functional.1} parent=1 // pred_check_branch
      %270 = sbr.rel (0) target = $region45
    $region44: #{predictive_functional.1} parent=1 // pred_region
      _
    $region45: #{predictive_functional.1} parent=1 // pred_fallthru
      _
    %271 = vsyncpa [#allocation3], 1

</llo_original>
